<compile_context>
chip_gen: v7x
topology: tpu7x:2x2x1
jax: 0.10.0
libtpu: 0.0.40
codegen_flags: <defaults>
</compile_context>

<pallas_src>
import functools

import jax
import jax.numpy as jnp
from jax import lax
from jax.experimental import pallas as pl
from jax.experimental.pallas import tpu as pltpu


def _down_kernel(x_ref, w_ref, o_ref, pad_ref, col_ref, *, Hp, Wp, Cin, Cout, R):
    # x_ref:   (1, 4, M, Cin) bf16  -- 2x2 pool taps on leading axis; rows are the
    #                                  W-zero-padded pooled grid flattened (Hp, Wpad)
    # w_ref:   (9*Cin, Cout)  bf16  -- conv taps, K index = (ky*3+kx)*Cin + ci
    # o_ref:   (1, M, Cout)         -- flat conv output (2 junk cols/row, cropped later)
    # pad_ref: (R, Cin)       bf16  -- flat zero-padded pooled map (VMEM scratch)
    # col_ref: (M, 9*Cin)     bf16  -- im2col matrix (VMEM scratch)
    Wpad = Wp + 2
    M = Hp * Wpad
    cdt = pad_ref.dtype

    # --- MaxPool2d(2): max over 4 full-tile taps (pure VPU, bf16, exact) -----
    x = x_ref[0]                                   # (4, M, Cin)
    pooled = jnp.maximum(jnp.maximum(x[0], x[1]),
                         jnp.maximum(x[2], x[3]))  # (M, Cin) bf16

    # --- build flat zero-padded pooled map -----------------------------------
    # top pad row block, interior (already W-padded with zeros), bottom pad + slack
    pad_ref[0:Wpad, :] = jnp.zeros((Wpad, Cin), cdt)
    pad_ref[Wpad:Wpad + M, :] = pooled
    pad_ref[Wpad + M:R, :] = jnp.zeros((R - Wpad - M, Cin), cdt)

    # --- im2col: 9 contiguous tap row-slices -> (M, 9*Cin) -------------------
    for ky in range(3):
        for kx in range(3):
            t = ky * 3 + kx
            d = ky * Wpad + kx
            col_ref[:, t * Cin:(t + 1) * Cin] = pad_ref[d:d + M, :]

    # --- 3x3 conv: ONE (M, 9*Cin)x(9*Cin, Cout) matmul on the MXU, f32 acc ---
    acc = jnp.dot(col_ref[...], w_ref[...], preferred_element_type=jnp.float32)

    # --- LeakyReLU(0.2) in f32, single full-block store ----------------------
    acc = jnp.where(acc >= 0.0, acc, 0.2 * acc)
    o_ref[0] = acc.astype(o_ref.dtype)


def _vmem_capacity_bytes():
    """Best-effort per-core VMEM capacity query (generation-aware tuning)."""
    try:
        info = pltpu.get_tpu_info()
        cap = getattr(info, "vmem_capacity_bytes", None)
        if cap:
            return int(cap)
    except Exception:
        pass
    return 64 << 20   # conservative default (v7x-sized VMEM)


def down_forward(x_nchw, w_oihw, *, conv_dtype=jnp.bfloat16, out_dtype=None):
    """x_nchw: (N, Cin, H, W) f32; w_oihw: (Cout, Cin, 3, 3) f32 (PyTorch layout).
    Returns NHWC output (N, H//2, W//2, Cout) in `out_dtype` (default x.dtype)."""
    N, Cin, H, W = x_nchw.shape
    Cout = w_oihw.shape[0]
    Hp, Wp = H // 2, W // 2
    Wpad = Wp + 2
    M = Hp * Wpad
    out_dtype = x_nchw.dtype if out_dtype is None else out_dtype

    # glue: crop odd edges (MaxPool2d floor), NCHW -> taps-leading NHWC (+ bf16
    # cast fused into the transpose pass, halving the kernel's input stream),
    # zero-pad the pooled-W axis (zeros pool to zero == conv zero padding),
    # flatten (Hp, Wpad) -> M rows.
    x_c = x_nchw[:, :, :Hp * 2, :Wp * 2]
    x5 = x_c.reshape(N, Cin, Hp, 2, Wp, 2)
    xt = jnp.transpose(x5, (0, 3, 5, 2, 4, 1)).astype(conv_dtype)   # (N,2,2,Hp,Wp,Cin)
    xt = xt.reshape(N, 4, Hp, Wp, Cin)
    xt = jnp.pad(xt, ((0, 0), (0, 0), (0, 0), (1, 1), (0, 0)))
    x_flat = xt.reshape(N, 4, M, Cin)

    # weights: (Cout,Cin,3,3) -> (9*Cin, Cout); K index = (ky*3+kx)*Cin + ci
    wk = jnp.transpose(w_oihw, (2, 3, 1, 0)).reshape(9 * Cin, Cout).astype(conv_dtype)

    # flat padded pooled rows (+8 slack so the (2,2) tap slice stays in-bounds)
    R = (Hp + 2) * Wpad + 8

    # VMEM budget: true block footprint (double-buffered in/out/weights + both
    # scratches), with ~1.35x margin, capped per-generation.
    csize = jnp.dtype(conv_dtype).itemsize
    osize = jnp.dtype(out_dtype).itemsize
    est = (2 * 4 * M * Cin * csize          # double-buffered tap blocks (bf16)
           + 2 * M * Cout * osize           # double-buffered output blocks
           + 2 * 9 * Cin * Cout * csize     # double-buffered weights
           + R * Cin * csize                # flat padded pooled scratch
           + M * 9 * Cin * csize)           # im2col scratch
    vmem_cap = _vmem_capacity_bytes()
    hard_cap = (48 << 20) if vmem_cap <= (64 << 20) else (100 << 20)
    vmem_limit = int(min(max(int(1.35 * est) + (2 << 20), 32 << 20), hard_cap))

    kernel = functools.partial(_down_kernel, Hp=Hp, Wp=Wp, Cin=Cin, Cout=Cout, R=R)
    out_flat = pl.pallas_call(
        kernel,
        out_shape=jax.ShapeDtypeStruct((N, M, Cout), out_dtype),
        grid_spec=pltpu.PrefetchScalarGridSpec(
            num_scalar_prefetch=0,
            grid=(N,),
            in_specs=[
                pl.BlockSpec((1, 4, M, Cin), lambda n: (n, 0, 0, 0)),
                pl.BlockSpec((9 * Cin, Cout), lambda n: (0, 0)),
            ],
            out_specs=pl.BlockSpec((1, M, Cout), lambda n: (n, 0, 0)),
            scratch_shapes=[
                pltpu.VMEM((R, Cin), conv_dtype),       # flat padded pooled map
                pltpu.VMEM((M, 9 * Cin), conv_dtype),   # im2col matrix
            ],
        ),
        compiler_params=pltpu.CompilerParams(
            dimension_semantics=("parallel",),
            vmem_limit_bytes=vmem_limit),
    )(x_flat, wk)

    # drop the 2 junk columns per row introduced by the flat-row conv trick
    # TODO(synk): keep the flat (N, M, Cout) layout downstream to skip this pass.
    out = out_flat.reshape(N, Hp, Wpad, Cout)[:, :, :Wp, :]
    return out


def _reference_nhwc(x_nchw, w_oihw, conv_dtype):
    pooled = lax.reduce_window(x_nchw, -jnp.inf, lax.max,
                               (1, 1, 2, 2), (1, 1, 2, 2), "VALID")
    conv = lax.conv_general_dilated(
        pooled.astype(conv_dtype), w_oihw.astype(conv_dtype),
        window_strides=(1, 1), padding="SAME",
        dimension_numbers=("NCHW", "OIHW", "NCHW"),
        preferred_element_type=jnp.float32)
    y = jnp.where(conv >= 0.0, conv, 0.2 * conv)
    return jnp.transpose(y, (0, 2, 3, 1)).astype(x_nchw.dtype)


if __name__ == "__main__":
    key = jax.random.PRNGKey(0)
    kx, kw = jax.random.split(key)

    N, Cin, H, W = 2, 4, 16, 16
    Cout = 8

    x = jax.random.normal(kx, (N, Cin, H, W), dtype=jnp.float32)
    # deterministic synthetic Conv2d weight (bias=False in the module)
    w = (jax.random.normal(kw, (Cout, Cin, 3, 3), dtype=jnp.float32)
         * (1.0 / jnp.sqrt(Cin * 9.0)))

    out_nhwc = jax.block_until_ready(down_forward(x, w))          # (2, 8, 8, 8)
    assert out_nhwc.shape == (N, H // 2, W // 2, Cout)

    # tight check against a reference with matching bf16 matmul inputs
    ref_bf16 = _reference_nhwc(x, w, jnp.bfloat16)
    assert jnp.allclose(out_nhwc, ref_bf16, atol=2e-3, rtol=2e-2), (
        float(jnp.max(jnp.abs(out_nhwc - ref_bf16))))
    # loose sanity check against the full-f32 module semantics
    ref_f32 = _reference_nhwc(x, w, jnp.float32)
    assert jnp.allclose(out_nhwc, ref_f32, atol=5e-2, rtol=5e-2)

    print("KERNEL_OK")
</pallas_src>

<mosaic_0001>
module attributes {stable_mosaic.version = 11 : i64} {
  func.func @_down_kernel(%arg0: i32, %arg1: memref<1x4x80x4xbf16, #tpu.memory_space<vmem>>, %arg2: memref<36x8xbf16, #tpu.memory_space<vmem>>, %arg3: memref<1x80x8xf32, #tpu.memory_space<vmem>>, %arg4: memref<108x4xbf16, #tpu.memory_space<vmem>>, %arg5: memref<80x36xbf16, #tpu.memory_space<vmem>>) attributes {dimension_semantics = [#tpu.dimension_semantics<parallel>], iteration_bounds = array<i64: 2>, scalar_prefetch = 0 : i64, scratch_operands = 2 : i64, tpu.core_type = #tpu.core_type<tc>, window_params = [{transform_indices = @transform_0, window_bounds = array<i64: 1, 4, 80, 4>}, {pipeline_mode = #tpu.pipeline_mode<synchronous>, transform_indices = @transform_1, window_bounds = array<i64: 36, 8>}, {transform_indices = @transform_2, window_bounds = array<i64: 1, 80, 8>}]} {
    %c0 = arith.constant 0 : index
    %c0_0 = arith.constant 0 : index
    %c0_1 = arith.constant 0 : index
    %c0_2 = arith.constant 0 : index
    %0 = vector.load %arg1[%c0, %c0_0, %c0_1, %c0_2] : memref<1x4x80x4xbf16, #tpu.memory_space<vmem>>, vector<1x4x80x4xbf16>
    %1 = vector.shape_cast %0 : vector<1x4x80x4xbf16> to vector<4x80x4xbf16>
    %2 = vector.extract_strided_slice %1 {offsets = [0, 0, 0], sizes = [1, 80, 4], strides = [1, 1, 1]} : vector<4x80x4xbf16> to vector<1x80x4xbf16>
    %3 = vector.shape_cast %2 : vector<1x80x4xbf16> to vector<80x4xbf16>
    %4 = vector.extract_strided_slice %1 {offsets = [1, 0, 0], sizes = [1, 80, 4], strides = [1, 1, 1]} : vector<4x80x4xbf16> to vector<1x80x4xbf16>
    %5 = vector.shape_cast %4 : vector<1x80x4xbf16> to vector<80x4xbf16>
    %6 = arith.maximumf %3, %5 : vector<80x4xbf16>
    %7 = vector.extract_strided_slice %1 {offsets = [2, 0, 0], sizes = [1, 80, 4], strides = [1, 1, 1]} : vector<4x80x4xbf16> to vector<1x80x4xbf16>
    %8 = vector.shape_cast %7 : vector<1x80x4xbf16> to vector<80x4xbf16>
    %9 = vector.extract_strided_slice %1 {offsets = [3, 0, 0], sizes = [1, 80, 4], strides = [1, 1, 1]} : vector<4x80x4xbf16> to vector<1x80x4xbf16>
    %10 = vector.shape_cast %9 : vector<1x80x4xbf16> to vector<80x4xbf16>
    %11 = arith.maximumf %8, %10 : vector<80x4xbf16>
    %12 = arith.maximumf %6, %11 : vector<80x4xbf16>
    %cst = arith.constant 0.000000e+00 : bf16
    %13 = vector.broadcast %cst : bf16 to vector<10x4xbf16>
    %c0_3 = arith.constant 0 : index
    %c0_4 = arith.constant 0 : index
    %14 = vector.load %arg4[%c0_3, %c0_4] : memref<108x4xbf16, #tpu.memory_space<vmem>>, vector<10x4xbf16>
    tpu.vector_store %arg4[%c0_3, %c0_4], %13 {strides = array<i32>} : memref<108x4xbf16, #tpu.memory_space<vmem>>, vector<10x4xbf16>,
    %c10 = arith.constant 10 : index
    %c0_5 = arith.constant 0 : index
    %15 = vector.load %arg4[%c10, %c0_5] : memref<108x4xbf16, #tpu.memory_space<vmem>>, vector<80x4xbf16>
    tpu.vector_store %arg4[%c10, %c0_5], %12 {strides = array<i32>} : memref<108x4xbf16, #tpu.memory_space<vmem>>, vector<80x4xbf16>,
    %cst_6 = arith.constant 0.000000e+00 : bf16
    %16 = vector.broadcast %cst_6 : bf16 to vector<18x4xbf16>
    %c90 = arith.constant 90 : index
    %c0_7 = arith.constant 0 : index
    %17 = vector.load %arg4[%c90, %c0_7] : memref<108x4xbf16, #tpu.memory_space<vmem>>, vector<18x4xbf16>
    tpu.vector_store %arg4[%c90, %c0_7], %16 {strides = array<i32>} : memref<108x4xbf16, #tpu.memory_space<vmem>>, vector<18x4xbf16>,
    %c0_8 = arith.constant 0 : index
    %c0_9 = arith.constant 0 : index
    %18 = vector.load %arg4[%c0_8, %c0_9] : memref<108x4xbf16, #tpu.memory_space<vmem>>, vector<80x4xbf16>
    %c0_10 = arith.constant 0 : index
    %c0_11 = arith.constant 0 : index
    %19 = vector.load %arg5[%c0_10, %c0_11] : memref<80x36xbf16, #tpu.memory_space<vmem>>, vector<80x4xbf16>
    tpu.vector_store %arg5[%c0_10, %c0_11], %18 {strides = array<i32>} : memref<80x36xbf16, #tpu.memory_space<vmem>>, vector<80x4xbf16>,
    %c1 = arith.constant 1 : index
    %c0_12 = arith.constant 0 : index
    %20 = vector.load %arg4[%c1, %c0_12] : memref<108x4xbf16, #tpu.memory_space<vmem>>, vector<80x4xbf16>
    %c0_13 = arith.constant 0 : index
    %c4 = arith.constant 4 : index
    %21 = vector.load %arg5[%c0_13, %c4] : memref<80x36xbf16, #tpu.memory_space<vmem>>, vector<80x4xbf16>
    tpu.vector_store %arg5[%c0_13, %c4], %20 {strides = array<i32>} : memref<80x36xbf16, #tpu.memory_space<vmem>>, vector<80x4xbf16>,
    %c2 = arith.constant 2 : index
    %c0_14 = arith.constant 0 : index
    %22 = vector.load %arg4[%c2, %c0_14] : memref<108x4xbf16, #tpu.memory_space<vmem>>, vector<80x4xbf16>
    %c0_15 = arith.constant 0 : index
    %c8 = arith.constant 8 : index
    %23 = vector.load %arg5[%c0_15, %c8] : memref<80x36xbf16, #tpu.memory_space<vmem>>, vector<80x4xbf16>
    tpu.vector_store %arg5[%c0_15, %c8], %22 {strides = array<i32>} : memref<80x36xbf16, #tpu.memory_space<vmem>>, vector<80x4xbf16>,
    %c10_16 = arith.constant 10 : index
    %c0_17 = arith.constant 0 : index
    %24 = vector.load %arg4[%c10_16, %c0_17] : memref<108x4xbf16, #tpu.memory_space<vmem>>, vector<80x4xbf16>
    %c0_18 = arith.constant 0 : index
    %c12 = arith.constant 12 : index
    %25 = vector.load %arg5[%c0_18, %c12] : memref<80x36xbf16, #tpu.memory_space<vmem>>, vector<80x4xbf16>
    tpu.vector_store %arg5[%c0_18, %c12], %24 {strides = array<i32>} : memref<80x36xbf16, #tpu.memory_space<vmem>>, vector<80x4xbf16>,
    %c11 = arith.constant 11 : index
    %c0_19 = arith.constant 0 : index
    %26 = vector.load %arg4[%c11, %c0_19] : memref<108x4xbf16, #tpu.memory_space<vmem>>, vector<80x4xbf16>
    %c0_20 = arith.constant 0 : index
    %c16 = arith.constant 16 : index
    %27 = vector.load %arg5[%c0_20, %c16] : memref<80x36xbf16, #tpu.memory_space<vmem>>, vector<80x4xbf16>
    tpu.vector_store %arg5[%c0_20, %c16], %26 {strides = array<i32>} : memref<80x36xbf16, #tpu.memory_space<vmem>>, vector<80x4xbf16>,
    %c12_21 = arith.constant 12 : index
    %c0_22 = arith.constant 0 : index
    %28 = vector.load %arg4[%c12_21, %c0_22] : memref<108x4xbf16, #tpu.memory_space<vmem>>, vector<80x4xbf16>
    %c0_23 = arith.constant 0 : index
    %c20 = arith.constant 20 : index
    %29 = vector.load %arg5[%c0_23, %c20] : memref<80x36xbf16, #tpu.memory_space<vmem>>, vector<80x4xbf16>
    tpu.vector_store %arg5[%c0_23, %c20], %28 {strides = array<i32>} : memref<80x36xbf16, #tpu.memory_space<vmem>>, vector<80x4xbf16>,
    %c20_24 = arith.constant 20 : index
    %c0_25 = arith.constant 0 : index
    %30 = vector.load %arg4[%c20_24, %c0_25] : memref<108x4xbf16, #tpu.memory_space<vmem>>, vector<80x4xbf16>
    %c0_26 = arith.constant 0 : index
    %c24 = arith.constant 24 : index
    %31 = vector.load %arg5[%c0_26, %c24] : memref<80x36xbf16, #tpu.memory_space<vmem>>, vector<80x4xbf16>
    tpu.vector_store %arg5[%c0_26, %c24], %30 {strides = array<i32>} : memref<80x36xbf16, #tpu.memory_space<vmem>>, vector<80x4xbf16>,
    %c21 = arith.constant 21 : index
    %c0_27 = arith.constant 0 : index
    %32 = vector.load %arg4[%c21, %c0_27] : memref<108x4xbf16, #tpu.memory_space<vmem>>, vector<80x4xbf16>
    %c0_28 = arith.constant 0 : index
    %c28 = arith.constant 28 : index
    %33 = vector.load %arg5[%c0_28, %c28] : memref<80x36xbf16, #tpu.memory_space<vmem>>, vector<80x4xbf16>
    tpu.vector_store %arg5[%c0_28, %c28], %32 {strides = array<i32>} : memref<80x36xbf16, #tpu.memory_space<vmem>>, vector<80x4xbf16>,
    %c22 = arith.constant 22 : index
    %c0_29 = arith.constant 0 : index
    %34 = vector.load %arg4[%c22, %c0_29] : memref<108x4xbf16, #tpu.memory_space<vmem>>, vector<80x4xbf16>
    %c0_30 = arith.constant 0 : index
    %c32 = arith.constant 32 : index
    %35 = vector.load %arg5[%c0_30, %c32] : memref<80x36xbf16, #tpu.memory_space<vmem>>, vector<80x4xbf16>
    tpu.vector_store %arg5[%c0_30, %c32], %34 {strides = array<i32>} : memref<80x36xbf16, #tpu.memory_space<vmem>>, vector<80x4xbf16>,
    %c0_31 = arith.constant 0 : index
    %c0_32 = arith.constant 0 : index
    %36 = vector.load %arg5[%c0_31, %c0_32] : memref<80x36xbf16, #tpu.memory_space<vmem>>, vector<80x36xbf16>
    %c0_33 = arith.constant 0 : index
    %c0_34 = arith.constant 0 : index
    %37 = vector.load %arg2[%c0_33, %c0_34] : memref<36x8xbf16, #tpu.memory_space<vmem>>, vector<36x8xbf16>
    %cst_35 = arith.constant dense<0.000000e+00> : vector<80x8xf32>
    %38 = tpu.matmul %36, %37, %cst_35 {dimension_numbers = #tpu.dot_dimension_numbers<[1], [0], [0], [1], [0, 0, 1, 1], [], []>} : vector<80x36xbf16>, vector<36x8xbf16>, vector<80x8xf32> -> vector<80x8xf32>
    %cst_36 = arith.constant 0.000000e+00 : f32
    %39 = vector.broadcast %cst_36 : f32 to vector<80x8xf32>
    %40 = arith.cmpf oge, %38, %39 : vector<80x8xf32>
    %cst_37 = arith.constant 2.000000e-01 : f32
    %41 = vector.broadcast %cst_37 : f32 to vector<80x8xf32>
    %42 = arith.mulf %41, %38 : vector<80x8xf32>
    %43 = arith.select %40, %38, %42 : vector<80x8xi1>, vector<80x8xf32>
    %c0_38 = arith.constant 0 : index
    %c0_39 = arith.constant 0 : index
    %c0_40 = arith.constant 0 : index
    %44 = vector.load %arg3[%c0_38, %c0_39, %c0_40] : memref<1x80x8xf32, #tpu.memory_space<vmem>>, vector<1x80x8xf32>
    %45 = vector.shape_cast %44 : vector<1x80x8xf32> to vector<80x8xf32>
    %46 = vector.shape_cast %43 : vector<80x8xf32> to vector<1x80x8xf32>
    tpu.vector_store %arg3[%c0_38, %c0_39, %c0_40], %46 {strides = array<i32>} : memref<1x80x8xf32, #tpu.memory_space<vmem>>, vector<1x80x8xf32>,
    return
  }
  func.func @transform_0(%arg0: i32) -> (i32, i32, i32, i32) {
    %c0_i32 = arith.constant 0 : i32
    %c0_i32_0 = arith.constant 0 : i32
    %c0_i32_1 = arith.constant 0 : i32
    %c0_i32_2 = arith.constant 0 : i32
    return %arg0, %c0_i32, %c0_i32_0, %c0_i32_1 : i32, i32, i32, i32
  }
  func.func @transform_1(%arg0: i32) -> (i32, i32) {
    %c0_i32 = arith.constant 0 : i32
    %c0_i32_0 = arith.constant 0 : i32
    %c0_i32_1 = arith.constant 0 : i32
    return %c0_i32, %c0_i32_0 : i32, i32
  }
  func.func @transform_2(%arg0: i32) -> (i32, i32, i32) {
    %c0_i32 = arith.constant 0 : i32
    %c0_i32_0 = arith.constant 0 : i32
    %c0_i32_1 = arith.constant 0 : i32
    return %arg0, %c0_i32, %c0_i32_0 : i32, i32, i32
  }
}

</mosaic_0001>

<llo_original>
// kernel: tpu_custom_call.1
$region0: #{tpu_custom_call.1}
  #allocation0 [shape = 'u32[]', space=smem, size = 0x4, offset = 0x4, fixed_abs, tag = 'smem constant byte address 0x4 - core index']
  #allocation1 [shape = 'u32[144,128]{1,0:T(1,128)}', space=vmem, size = 0x12000, scoped, tag = 'internal scratch']
  #allocation2 [shape = 'bf16[108,4]{1,0:T(8,128)(2,1)}', space=vmem, size = 0x7000, scoped, tag = 'scratch operand']
  #allocation3 [shape = 'bf16[80,36]{1,0:T(16,128)(2,1)}', space=vmem, size = 0x5000, scoped, tag = 'scratch operand']
  %s0 = inlined_call_operand.vmem [shape: bf16[2,4,80,4], index: 0, kind: input, shape index: {}]
  %s1 = inlined_call_operand.vmem [shape: bf16[36,8], index: 1, kind: input, shape index: {}]
  %s2 = inlined_call_operand.vmem [shape: f32[2,80,8], index: 2, kind: output, shape index: {}]
  %s3 = sld [smem:[#allocation0]]
  $region41: #{tpu_custom_call.1} parent=0
    _
  %s5 = ssub.s32 1, %s3
  %s6 = scalar_select 0, %s5, %s3
  loop: start=0, step=1, limit=4
  $region2: #{tpu_custom_call.1} parent=0 // loop_pre_header
    _
  $region3: #{tpu_custom_call.1} parent=0 // loop_header
    %s8 = sphi 0, %s12
    %p9 = scmp.ge.s32.totalorder %s8, 4
    %s18 = sphi 0, %s20
    %s21 = sphi 0, %s18
    %s22 = sphi 0, %s21
    %s38 = sphi 0, %s22
    %s42 = sphi 0, %s42
    %s44 = sphi 0, %s42
    %s45 = sphi 0, %s44
    %s59 = sphi 0, %s45
    %s65 = sphi 0, %s67
    %s68 = sphi 0, %s65
    %s69 = sphi 0, %s68
    %s85 = sphi 0, %s69
  $region4: #{tpu_custom_call.1} parent=0 // loop_header_branch
    %11 = sbr.rel (%p9) target = $region8
  $region5: #{tpu_custom_call.1} parent=0 // loop_body
    %s13 = ssub.s32 %s8, 1
    %s14 = ssub.s32 %s8, 2
    %s15 = sadd.s32 %s8, 1
    %s16 = ssub.s32 %s8, %s15
    %p17 = scmp.eq.s32.totalorder %s16, 0
    %s19 = sadd.s32 %s18, 1
    %s20 = scalar_select %p17, %s18, %s19
    %p23 = pneg %p17
    %p24 = scmp.eq.s32.totalorder %s8, 1
    %p25 = por %p23, %p24
    %p26 = scmp.ne.s32.totalorder %s18, %s21
    %p27 = scmp.eq.s32.totalorder %s8, 0
    %p28 = por %p26, %p27
    %p29 = scmp.ne.s32.totalorder %s18, %s21
    %p30 = scmp.eq.s32.totalorder %s13, 1
    %p31 = por %p29, %p30
    %p32 = scmp.ne.s32.totalorder %s21, %s22
    %p33 = scmp.eq.s32.totalorder %s13, 0
    %p34 = por %p32, %p33
    %p35 = scmp.ne.s32.totalorder %s21, %s22
    %p36 = scmp.eq.s32.totalorder %s14, 1
    %p37 = por %p35, %p36
    %p39 = scmp.ne.s32.totalorder %s22, %s38
    %p40 = scmp.eq.s32.totalorder %s14, 0
    %p41 = por %p39, %p40
    %s43 = sadd.s32 %s42, 1
    %p46 = scmp.eq.s32.totalorder %s8, 1
    %p47 = scmp.ne.s32.totalorder %s42, %s44
    %p48 = scmp.eq.s32.totalorder %s8, 0
    %p49 = por %p47, %p48
    %p50 = scmp.ne.s32.totalorder %s42, %s44
    %p51 = scmp.eq.s32.totalorder %s13, 1
    %p52 = por %p50, %p51
    %p53 = scmp.ne.s32.totalorder %s44, %s45
    %p54 = scmp.eq.s32.totalorder %s13, 0
    %p55 = por %p53, %p54
    %p56 = scmp.ne.s32.totalorder %s44, %s45
    %p57 = scmp.eq.s32.totalorder %s14, 1
    %p58 = por %p56, %p57
    %p60 = scmp.ne.s32.totalorder %s45, %s59
    %p61 = scmp.eq.s32.totalorder %s14, 0
    %p62 = por %p60, %p61
    %s63 = ssub.s32 %s8, %s15
    %p64 = scmp.eq.s32.totalorder %s63, 0
    %s66 = sadd.s32 %s65, 1
    %s67 = scalar_select %p64, %s65, %s66
    %p70 = pneg %p64
    %p71 = scmp.eq.s32.totalorder %s8, 1
    %p72 = por %p70, %p71
    %p73 = scmp.ne.s32.totalorder %s65, %s68
    %p74 = scmp.eq.s32.totalorder %s8, 0
    %p75 = por %p73, %p74
    %p76 = scmp.ne.s32.totalorder %s65, %s68
    %p77 = scmp.eq.s32.totalorder %s13, 1
    %p78 = por %p76, %p77
    %p79 = scmp.ne.s32.totalorder %s68, %s69
    %p80 = scmp.eq.s32.totalorder %s13, 0
    %p81 = por %p79, %p80
    %p82 = scmp.ne.s32.totalorder %s68, %s69
    %p83 = scmp.eq.s32.totalorder %s14, 1
    %p84 = por %p82, %p83
    %p86 = scmp.ne.s32.totalorder %s69, %s85
    %p87 = scmp.eq.s32.totalorder %s14, 0
    %p88 = por %p86, %p87
    %p89 = scmp.le.s32.totalorder 1, %s8
    %p90 = scmp.lt.s32.totalorder %s8, 3
    %p91 = pnand %p89, %p90
    %p92 = pneg %p91
    // Predicated region
    $region9: #{tpu_custom_call.1} parent=5 // pred_check
      _
    $region10: #{tpu_custom_call.1} parent=5 // pred_check_branch
      %94 = sbr.rel (%p91) target = $region12
    $region11: #{tpu_custom_call.1} parent=5 // pred_region
      %s95 = ssub.s32 %s8, 1
      // Predicated region
      $region13: #{tpu_custom_call.1} parent=11 // pred_check
        %p96 = pneg %p55
      $region14: #{tpu_custom_call.1} parent=11 // pred_check_branch
        %98 = sbr.rel (%p96) target = $region16
      $region15: #{tpu_custom_call.1} parent=11 // pred_region
        _
      $region16: #{tpu_custom_call.1} parent=11 // pred_fallthru
        _
    $region12: #{tpu_custom_call.1} parent=5 // pred_fallthru
      _
    %p99 = scmp.lt.s32.totalorder %s8, 2
    // Predicated region
    $region17: #{tpu_custom_call.1} parent=5 // pred_check
      %p100 = pneg %p99
    $region18: #{tpu_custom_call.1} parent=5 // pred_check_branch
      %102 = sbr.rel (%p100) target = $region20
    $region19: #{tpu_custom_call.1} parent=5 // pred_region
      // Predicated region
      $region21: #{tpu_custom_call.1} parent=19 // pred_check
        %p103 = pneg %p28
      $region22: #{tpu_custom_call.1} parent=19 // pred_check_branch
        %105 = sbr.rel (%p103) target = $region24
      $region23: #{tpu_custom_call.1} parent=19 // pred_region
        %p106 = scmp.lt.s32.totalorder %s8, 1
        %s107 = scalar_select %p106, %s8, 1
        %s108 = smul.addr %s107, 40
        %s109 = smul.addr %s108, 4
        %s110 = scalar_lea.vmem %s0, %s109
      $region24: #{tpu_custom_call.1} parent=19 // pred_fallthru
        _
    $region20: #{tpu_custom_call.1} parent=5 // pred_fallthru
      _
    %p111 = scmp.le.s32.totalorder 1, %s8
    %p112 = scmp.lt.s32.totalorder %s8, 3
    %p113 = pnand %p111, %p112
    %p114 = pneg %p113
    // Predicated region
    $region25: #{tpu_custom_call.1} parent=5 // pred_check
      _
    $region26: #{tpu_custom_call.1} parent=5 // pred_check_branch
      %116 = sbr.rel (%p113) target = $region28
    $region27: #{tpu_custom_call.1} parent=5 // pred_region
      %s117 = ssub.s32 %s8, 1
      %p118 = scmp.lt.s32.totalorder %s13, 1
      %s119 = scalar_select %p118, %s13, 1
      %s120 = smul.addr %s119, 40
      %s121 = smul.addr %s120, 4
      %s122 = scalar_lea.vmem %s0, %s121
      %p123 = pneg %p34
      %p124 = pneg %p31
      %p125 = pneg %p55
      %p126 = pneg %p52
      %p127 = pneg %p81
      %p128 = pneg %p78
      %p129 = scmp.lt.s32.totalorder %s13, 1
      %s130 = scalar_select %p129, %s13, 1
      %s131 = smul.addr %s130, 10
      %s132 = smul.addr %s131, 8
      %s133 = scalar_lea.vmem %s2, %s132
      %p134 = scmp.lt.s32.totalorder %s13, 1
      %s135 = scalar_select %p134, %s13, 1
      %s136 = smul.addr %s135, 40
      %s137 = smul.addr %s136, 4
      %s138 = scalar_lea.vmem %s0, %s137
      %p139 = scmp.lt.s32.totalorder %s13, 1
      %s140 = scalar_select %p139, %s13, 1
      %s141 = smul.addr %s140, 10
      %s142 = smul.addr %s141, 8
      %s143 = scalar_lea.vmem %s2, %s142
      %v145 = vld [vmem:[%s138] sm:$0xf]
      %v146 = vld [vmem:[%s138 + $0x4] sm:$0xf]
      %v147 = vld [vmem:[%s138 + $0x8] sm:$0xf]
      %v148 = vld [vmem:[%s138 + $0xc] sm:$0xf]
      %v149 = vld [vmem:[%s138 + $0x10] sm:$0xf]
      %v150 = vld [vmem:[%s138 + $0x14] sm:$0xf]
      %v151 = vld [vmem:[%s138 + $0x18] sm:$0xf]
      %v152 = vld [vmem:[%s138 + $0x1c] sm:$0xf]
      %v153 = vld [vmem:[%s138 + $0x20] sm:$0xf]
      %v154 = vld [vmem:[%s138 + $0x24] sm:$0xf]
      %v155 = vld [vmem:[%s138 + $0x28] sm:$0xf]
      %v156 = vld [vmem:[%s138 + $0x2c] sm:$0xf]
      %v157 = vld [vmem:[%s138 + $0x30] sm:$0xf]
      %v158 = vld [vmem:[%s138 + $0x34] sm:$0xf]
      %v159 = vld [vmem:[%s138 + $0x38] sm:$0xf]
      %v160 = vld [vmem:[%s138 + $0x3c] sm:$0xf]
      %v161 = vld [vmem:[%s138 + $0x40] sm:$0xf]
      %v162 = vld [vmem:[%s138 + $0x44] sm:$0xf]
      %v163 = vld [vmem:[%s138 + $0x48] sm:$0xf]
      %v164 = vld [vmem:[%s138 + $0x4c] sm:$0xf]
      %v165 = vld [vmem:[%s138 + $0x50] sm:$0xf]
      %v166 = vld [vmem:[%s138 + $0x54] sm:$0xf]
      %v167 = vld [vmem:[%s138 + $0x58] sm:$0xf]
      %v168 = vld [vmem:[%s138 + $0x5c] sm:$0xf]
      %v169 = vld [vmem:[%s138 + $0x60] sm:$0xf]
      %v170 = vld [vmem:[%s138 + $0x64] sm:$0xf]
      %v171 = vld [vmem:[%s138 + $0x68] sm:$0xf]
      %v172 = vld [vmem:[%s138 + $0x6c] sm:$0xf]
      %v173 = vld [vmem:[%s138 + $0x70] sm:$0xf]
      %v174 = vld [vmem:[%s138 + $0x74] sm:$0xf]
      %v175 = vld [vmem:[%s138 + $0x78] sm:$0xf]
      %v176 = vld [vmem:[%s138 + $0x7c] sm:$0xf]
      %v177 = vld [vmem:[%s138 + $0x80] sm:$0xf]
      %v178 = vld [vmem:[%s138 + $0x84] sm:$0xf]
      %v179 = vld [vmem:[%s138 + $0x88] sm:$0xf]
      %v180 = vld [vmem:[%s138 + $0x8c] sm:$0xf]
      %v181 = vld [vmem:[%s138 + $0x90] sm:$0xf]
      %v182 = vld [vmem:[%s138 + $0x94] sm:$0xf]
      %v183 = vld [vmem:[%s138 + $0x98] sm:$0xf]
      %v184 = vld [vmem:[%s138 + $0x9c] sm:$0xf]
      %v185 = vmax.bf16 %v145, %v155
      %v186 = vmax.bf16 %v146, %v156
      %v187 = vmax.bf16 %v147, %v157
      %v188 = vmax.bf16 %v148, %v158
      %v189 = vmax.bf16 %v149, %v159
      %v190 = vmax.bf16 %v150, %v160
      %v191 = vmax.bf16 %v151, %v161
      %v192 = vmax.bf16 %v152, %v162
      %v193 = vmax.bf16 %v153, %v163
      %v194 = vmax.bf16 %v154, %v164
      %v195 = vmax.bf16 %v165, %v175
      %v196 = vmax.bf16 %v166, %v176
      %v197 = vmax.bf16 %v167, %v177
      %v198 = vmax.bf16 %v168, %v178
      %v199 = vmax.bf16 %v169, %v179
      %v200 = vmax.bf16 %v170, %v180
      %v201 = vmax.bf16 %v171, %v181
      %v202 = vmax.bf16 %v172, %v182
      %v203 = vmax.bf16 %v173, %v183
      %v204 = vmax.bf16 %v174, %v184
      %v205 = vmax.bf16 %v185, %v195
      %v206 = vmax.bf16 %v186, %v196
      %v207 = vmax.bf16 %v187, %v197
      %v208 = vmax.bf16 %v188, %v198
      %v209 = vmax.bf16 %v189, %v199
      %v210 = vmax.bf16 %v190, %v200
      %v211 = vmax.bf16 %v191, %v201
      %v212 = vmax.bf16 %v192, %v202
      %v213 = vmax.bf16 %v193, %v203
      %v214 = vmax.bf16 %v194, %v204
      %vm215 = vcmask 27648
      %216 = vst.msk [vmem:[#allocation2] sm:$0xf] %vm215, 0
      %vm217 = vcmask 24576
      %218 = vst.msk [vmem:[#allocation2 + $0x4] sm:$0x1] %vm217, 0
      %vm229 = vcmask 1040384
      %vm230 = vcmask 1044484
      %vm231 = vmor %vm229, %vm230
      %v232 = vrot.slane %v205, 7
      %v233 = vrot.slane %v232, 4
      %v234 = vrot.slane %v206, 7
      %v235 = vsel %vm231, %v233, %v234
      %v236 = vrot.slane %v234, 4
      %v237 = vrot.slane %v207, 7
      %v238 = vsel %vm231, %v236, %v237
      %v239 = vrot.slane %v237, 4
      %v240 = vrot.slane %v208, 7
      %v241 = vsel %vm231, %v239, %v240
      %v242 = vrot.slane %v240, 4
      %v243 = vrot.slane %v209, 7
      %v244 = vsel %vm231, %v242, %v243
      %v245 = vrot.slane %v243, 4
      %v246 = vrot.slane %v210, 7
      %v247 = vsel %vm231, %v245, %v246
      %v248 = vrot.slane %v246, 4
      %v249 = vrot.slane %v211, 7
      %v250 = vsel %vm231, %v248, %v249
      %v251 = vrot.slane %v249, 4
      %v252 = vrot.slane %v212, 7
      %v253 = vsel %vm231, %v251, %v252
      %v254 = vrot.slane %v252, 4
      %v255 = vrot.slane %v213, 7
      %v256 = vsel %vm231, %v254, %v255
      %v257 = vrot.slane %v255, 4
      %v258 = vrot.slane %v214, 7
      %v259 = vsel %vm231, %v257, %v258
      %v260 = vrot.slane %v258, 4
      %vm272 = vcmask 27649
      %273 = vst.msk [vmem:[#allocation2 + $0x4] sm:$0xe] %vm272, %v232
      %274 = vst.msk [vmem:[#allocation2 + $0x8] sm:$0xf] %vm215, %v235
      %275 = vst.msk [vmem:[#allocation2 + $0xc] sm:$0xf] %vm215, %v238
      %276 = vst.msk [vmem:[#allocation2 + $0x10] sm:$0xf] %vm215, %v241
      %277 = vst.msk [vmem:[#allocation2 + $0x14] sm:$0xf] %vm215, %v244
      %278 = vst.msk [vmem:[#allocation2 + $0x18] sm:$0xf] %vm215, %v247
      %279 = vst.msk [vmem:[#allocation2 + $0x1c] sm:$0xf] %vm215, %v250
      %280 = vst.msk [vmem:[#allocation2 + $0x20] sm:$0xf] %vm215, %v253
      %281 = vst.msk [vmem:[#allocation2 + $0x24] sm:$0xf] %vm215, %v256
      %282 = vst.msk [vmem:[#allocation2 + $0x28] sm:$0xf] %vm215, %v259
      %283 = vst.msk [vmem:[#allocation2 + $0x2c] sm:$0x1] %vm217, %v260
      %284 = vst.msk [vmem:[#allocation2 + $0x2c] sm:$0xe] %vm272, 0
      %285 = vst.msk [vmem:[#allocation2 + $0x30] sm:$0xf] %vm215, 0
      %vm286 = vcmask 25600
      %287 = vst.msk [vmem:[#allocation2 + $0x34] sm:$0x3] %vm286, 0
      %v288 = vld [vmem:[#allocation2] sm:$0xf]
      %v289 = vld [vmem:[#allocation2 + $0x4] sm:$0xf]
      %v290 = vld [vmem:[#allocation2 + $0x8] sm:$0xf]
      %v291 = vld [vmem:[#allocation2 + $0xc] sm:$0xf]
      %v292 = vld [vmem:[#allocation2 + $0x10] sm:$0xf]
      %v293 = vld [vmem:[#allocation2 + $0x14] sm:$0xf]
      %v294 = vld [vmem:[#allocation2 + $0x18] sm:$0xf]
      %v295 = vld [vmem:[#allocation2 + $0x1c] sm:$0xf]
      %v296 = vld [vmem:[#allocation2 + $0x20] sm:$0xf]
      %v297 = vld [vmem:[#allocation2 + $0x24] sm:$0xf]
      %v308 = vunpack.c.l.b16 %v288
      %v309 = vunpack.c.l.b16 %v289
      %v310 = vunpack.c.l.b16 %v290
      %v311 = vunpack.c.l.b16 %v291
      %v312 = vunpack.c.l.b16 %v292
      %v313 = vunpack.c.l.b16 %v293
      %v314 = vunpack.c.l.b16 %v294
      %v315 = vunpack.c.l.b16 %v295
      %v316 = vunpack.c.l.b16 %v296
      %v317 = vunpack.c.l.b16 %v297
      %v318 = vpack.c.b16 %v309, %v308
      %v319 = vpack.c.b16 %v311, %v310
      %v320 = vpack.c.b16 %v313, %v312
      %v321 = vpack.c.b16 %v315, %v314
      %v322 = vpack.c.b16 %v317, %v316
      %vm328 = vcmask 31744
      %329 = vst.msk [vmem:[#allocation3] sm:$0xff] %vm328, %v318
      %330 = vst.msk [vmem:[#allocation3 + $0x8] sm:$0xff] %vm328, %v319
      %331 = vst.msk [vmem:[#allocation3 + $0x10] sm:$0xff] %vm328, %v320
      %332 = vst.msk [vmem:[#allocation3 + $0x18] sm:$0xff] %vm328, %v321
      %333 = vst.msk [vmem:[#allocation3 + $0x20] sm:$0xff] %vm328, %v322
      %v334 = vld [vmem:[#allocation2] sm:$0xf]
      %v335 = vld [vmem:[#allocation2 + $0x4] sm:$0xf]
      %v336 = vld [vmem:[#allocation2 + $0x8] sm:$0xf]
      %v337 = vld [vmem:[#allocation2 + $0xc] sm:$0xf]
      %v338 = vld [vmem:[#allocation2 + $0x10] sm:$0xf]
      %v339 = vld [vmem:[#allocation2 + $0x14] sm:$0xf]
      %v340 = vld [vmem:[#allocation2 + $0x18] sm:$0xf]
      %v341 = vld [vmem:[#allocation2 + $0x1c] sm:$0xf]
      %v342 = vld [vmem:[#allocation2 + $0x20] sm:$0xf]
      %v343 = vld [vmem:[#allocation2 + $0x24] sm:$0xf]
      %v344 = vld [vmem:[#allocation2 + $0x28] sm:$0x1]
      %v356 = vunpack.c.l.b16 %v334
      %v357 = vunpack.c.l.b16 %v335
      %v358 = vunpack.c.l.b16 %v336
      %v359 = vunpack.c.l.b16 %v337
      %v360 = vunpack.c.l.b16 %v338
      %v361 = vunpack.c.l.b16 %v339
      %v362 = vunpack.c.l.b16 %v340
      %v363 = vunpack.c.l.b16 %v341
      %v364 = vunpack.c.l.b16 %v342
      %v365 = vunpack.c.l.b16 %v343
      %v366 = vunpack.c.l.b16 %v344
      %v367 = vpack.c.b16 %v357, %v356
      %v368 = vpack.c.b16 %v359, %v358
      %v369 = vpack.c.b16 %v361, %v360
      %v370 = vpack.c.b16 %v363, %v362
      %v371 = vpack.c.b16 %v365, %v364
      %v372 = vpack.c.b16 %v366, %v366
      %vm373 = vsmask.f32 7424
      %v375 = vshrl.u32 %v367, 16
      %v377 = vshll.u32 %v367, 16
      %v379 = vrot.slane %v377, 1
      %v380 = vor.u32 %v375, %v379
      %v382 = vshll.u32 %v368, 16
      %v384 = vrot.slane %v382, 1
      %v385 = vsel %vm373, %v380, %v384
      %v386 = vshrl.u32 %v368, 16
      %v388 = vor.u32 %v386, %v384
      %v390 = vshll.u32 %v369, 16
      %v392 = vrot.slane %v390, 1
      %v393 = vsel %vm373, %v388, %v392
      %v394 = vshrl.u32 %v369, 16
      %v396 = vor.u32 %v394, %v392
      %v398 = vshll.u32 %v370, 16
      %v400 = vrot.slane %v398, 1
      %v401 = vsel %vm373, %v396, %v400
      %v402 = vshrl.u32 %v370, 16
      %v404 = vor.u32 %v402, %v400
      %v406 = vshll.u32 %v371, 16
      %v408 = vrot.slane %v406, 1
      %v409 = vsel %vm373, %v404, %v408
      %v410 = vshrl.u32 %v371, 16
      %v412 = vor.u32 %v410, %v408
      %v414 = vshll.u32 %v372, 16
      %v416 = vrot.slane %v414, 1
      %v417 = vsel %vm373, %v412, %v416
      %418 = vrot.lane.b32.xlu0 %v385, 4
      %v419 = vpop.permute.xlu0 %418
      %420 = vrot.lane.b32.xlu0 %v393, 4
      %v421 = vpop.permute.xlu0 %420
      %422 = vrot.lane.b32.xlu0 %v401, 4
      %v423 = vpop.permute.xlu0 %422
      %424 = vrot.lane.b32.xlu0 %v409, 4
      %v425 = vpop.permute.xlu0 %424
      %426 = vrot.lane.b32.xlu0 %v417, 4
      %v427 = vpop.permute.xlu0 %426
      %vm433 = vcmask 64544
      %434 = vst.msk [vmem:[#allocation3] sm:$0xff] %vm433, %v419
      %435 = vst.msk [vmem:[#allocation3 + $0x8] sm:$0xff] %vm433, %v421
      %436 = vst.msk [vmem:[#allocation3 + $0x10] sm:$0xff] %vm433, %v423
      %437 = vst.msk [vmem:[#allocation3 + $0x18] sm:$0xff] %vm433, %v425
      %438 = vst.msk [vmem:[#allocation3 + $0x20] sm:$0xff] %vm433, %v427
      %v439 = vld [vmem:[#allocation2] sm:$0xe]
      %v440 = vld [vmem:[#allocation2 + $0x4] sm:$0xf]
      %v441 = vld [vmem:[#allocation2 + $0x8] sm:$0xf]
      %v442 = vld [vmem:[#allocation2 + $0xc] sm:$0xf]
      %v443 = vld [vmem:[#allocation2 + $0x10] sm:$0xf]
      %v444 = vld [vmem:[#allocation2 + $0x14] sm:$0xf]
      %v445 = vld [vmem:[#allocation2 + $0x18] sm:$0xf]
      %v446 = vld [vmem:[#allocation2 + $0x1c] sm:$0xf]
      %v447 = vld [vmem:[#allocation2 + $0x20] sm:$0xf]
      %v448 = vld [vmem:[#allocation2 + $0x24] sm:$0xf]
      %v449 = vld [vmem:[#allocation2 + $0x28] sm:$0x1]
      %v461 = vunpack.c.l.b16 %v439
      %v462 = vunpack.c.l.b16 %v440
      %v463 = vunpack.c.l.b16 %v441
      %v464 = vunpack.c.l.b16 %v442
      %v465 = vunpack.c.l.b16 %v443
      %v466 = vunpack.c.l.b16 %v444
      %v467 = vunpack.c.l.b16 %v445
      %v468 = vunpack.c.l.b16 %v446
      %v469 = vunpack.c.l.b16 %v447
      %v470 = vunpack.c.l.b16 %v448
      %v471 = vunpack.c.l.b16 %v449
      %v472 = vpack.c.b16 %v462, %v461
      %v473 = vpack.c.b16 %v464, %v463
      %v474 = vpack.c.b16 %v466, %v465
      %v475 = vpack.c.b16 %v468, %v467
      %v476 = vpack.c.b16 %v470, %v469
      %v477 = vpack.c.b16 %v471, %v471
      %vm478 = vcmask 1046528
      %v479 = vrot.slane %v472, 1
      %v480 = vrot.slane %v473, 1
      %v481 = vsel %vm478, %v479, %v480
      %v482 = vrot.slane %v474, 1
      %v483 = vsel %vm478, %v480, %v482
      %v484 = vrot.slane %v475, 1
      %v485 = vsel %vm478, %v482, %v484
      %v486 = vrot.slane %v476, 1
      %v487 = vsel %vm478, %v484, %v486
      %v488 = vrot.slane %v477, 1
      %v489 = vsel %vm478, %v486, %v488
      %490 = vrot.lane.b32.xlu0 %v481, 8
      %v491 = vpop.permute.xlu0 %490
      %492 = vrot.lane.b32.xlu0 %v483, 8
      %v493 = vpop.permute.xlu0 %492
      %494 = vrot.lane.b32.xlu0 %v485, 8
      %v495 = vpop.permute.xlu0 %494
      %496 = vrot.lane.b32.xlu0 %v487, 8
      %v497 = vpop.permute.xlu0 %496
      %498 = vrot.lane.b32.xlu0 %v489, 8
      %v499 = vpop.permute.xlu0 %498
      %vm505 = vcmask 97344
      %506 = vst.msk [vmem:[#allocation3] sm:$0xff] %vm505, %v491
      %507 = vst.msk [vmem:[#allocation3 + $0x8] sm:$0xff] %vm505, %v493
      %508 = vst.msk [vmem:[#allocation3 + $0x10] sm:$0xff] %vm505, %v495
      %509 = vst.msk [vmem:[#allocation3 + $0x18] sm:$0xff] %vm505, %v497
      %510 = vst.msk [vmem:[#allocation3 + $0x20] sm:$0xff] %vm505, %v499
      %v511 = vld [vmem:[#allocation2 + $0x4] sm:$0xe]
      %v512 = vld [vmem:[#allocation2 + $0x8] sm:$0xf]
      %v513 = vld [vmem:[#allocation2 + $0xc] sm:$0xf]
      %v514 = vld [vmem:[#allocation2 + $0x10] sm:$0xf]
      %v515 = vld [vmem:[#allocation2 + $0x14] sm:$0xf]
      %v516 = vld [vmem:[#allocation2 + $0x18] sm:$0xf]
      %v517 = vld [vmem:[#allocation2 + $0x1c] sm:$0xf]
      %v518 = vld [vmem:[#allocation2 + $0x20] sm:$0xf]
      %v519 = vld [vmem:[#allocation2 + $0x24] sm:$0xf]
      %v520 = vld [vmem:[#allocation2 + $0x28] sm:$0xf]
      %v521 = vld [vmem:[#allocation2 + $0x2c] sm:$0x1]
      %v533 = vunpack.c.l.b16 %v511
      %v534 = vunpack.c.l.b16 %v512
      %v535 = vunpack.c.l.b16 %v513
      %v536 = vunpack.c.l.b16 %v514
      %v537 = vunpack.c.l.b16 %v515
      %v538 = vunpack.c.l.b16 %v516
      %v539 = vunpack.c.l.b16 %v517
      %v540 = vunpack.c.l.b16 %v518
      %v541 = vunpack.c.l.b16 %v519
      %v542 = vunpack.c.l.b16 %v520
      %v543 = vunpack.c.l.b16 %v521
      %v544 = vpack.c.b16 %v534, %v533
      %v545 = vpack.c.b16 %v536, %v535
      %v546 = vpack.c.b16 %v538, %v537
      %v547 = vpack.c.b16 %v540, %v539
      %v548 = vpack.c.b16 %v542, %v541
      %v549 = vpack.c.b16 %v543, %v543
      %v550 = vrot.slane %v544, 1
      %v551 = vrot.slane %v545, 1
      %v552 = vsel %vm478, %v550, %v551
      %v553 = vrot.slane %v546, 1
      %v554 = vsel %vm478, %v551, %v553
      %v555 = vrot.slane %v547, 1
      %v556 = vsel %vm478, %v553, %v555
      %v557 = vrot.slane %v548, 1
      %v558 = vsel %vm478, %v555, %v557
      %v559 = vrot.slane %v549, 1
      %v560 = vsel %vm478, %v557, %v559
      %561 = vrot.lane.b32.xlu0 %v552, 12
      %v562 = vpop.permute.xlu0 %561
      %563 = vrot.lane.b32.xlu0 %v554, 12
      %v564 = vpop.permute.xlu0 %563
      %565 = vrot.lane.b32.xlu0 %v556, 12
      %v566 = vpop.permute.xlu0 %565
      %567 = vrot.lane.b32.xlu0 %v558, 12
      %v568 = vpop.permute.xlu0 %567
      %569 = vrot.lane.b32.xlu0 %v560, 12
      %v570 = vpop.permute.xlu0 %569
      %vm576 = vcmask 130144
      %577 = vst.msk [vmem:[#allocation3] sm:$0xff] %vm576, %v562
      %578 = vst.msk [vmem:[#allocation3 + $0x8] sm:$0xff] %vm576, %v564
      %579 = vst.msk [vmem:[#allocation3 + $0x10] sm:$0xff] %vm576, %v566
      %580 = vst.msk [vmem:[#allocation3 + $0x18] sm:$0xff] %vm576, %v568
      %581 = vst.msk [vmem:[#allocation3 + $0x20] sm:$0xff] %vm576, %v570
      %v582 = vld [vmem:[#allocation2 + $0x4] sm:$0xe]
      %v583 = vld [vmem:[#allocation2 + $0x8] sm:$0xf]
      %v584 = vld [vmem:[#allocation2 + $0xc] sm:$0xf]
      %v585 = vld [vmem:[#allocation2 + $0x10] sm:$0xf]
      %v586 = vld [vmem:[#allocation2 + $0x14] sm:$0xf]
      %v587 = vld [vmem:[#allocation2 + $0x18] sm:$0xf]
      %v588 = vld [vmem:[#allocation2 + $0x1c] sm:$0xf]
      %v589 = vld [vmem:[#allocation2 + $0x20] sm:$0xf]
      %v590 = vld [vmem:[#allocation2 + $0x24] sm:$0xf]
      %v591 = vld [vmem:[#allocation2 + $0x28] sm:$0xf]
      %v592 = vld [vmem:[#allocation2 + $0x2c] sm:$0x3]
      %v604 = vunpack.c.l.b16 %v582
      %v605 = vunpack.c.l.b16 %v583
      %v606 = vunpack.c.l.b16 %v584
      %v607 = vunpack.c.l.b16 %v585
      %v608 = vunpack.c.l.b16 %v586
      %v609 = vunpack.c.l.b16 %v587
      %v610 = vunpack.c.l.b16 %v588
      %v611 = vunpack.c.l.b16 %v589
      %v612 = vunpack.c.l.b16 %v590
      %v613 = vunpack.c.l.b16 %v591
      %v614 = vunpack.c.l.b16 %v592
      %v615 = vpack.c.b16 %v605, %v604
      %v616 = vpack.c.b16 %v607, %v606
      %v617 = vpack.c.b16 %v609, %v608
      %v618 = vpack.c.b16 %v611, %v610
      %v619 = vpack.c.b16 %v613, %v612
      %v620 = vpack.c.b16 %v614, %v614
      %vm621 = vsmask.f32 6400
      %v623 = vshrl.u32 %v615, 16
      %v625 = vrot.slane %v623, 1
      %v626 = vshll.u32 %v615, 16
      %v628 = vrot.slane %v626, 2
      %v629 = vor.u32 %v625, %v628
      %v631 = vshrl.u32 %v616, 16
      %v633 = vrot.slane %v631, 1
      %v634 = vshll.u32 %v616, 16
      %v636 = vrot.slane %v634, 2
      %v637 = vor.u32 %v633, %v636
      %v638 = vsel %vm621, %v629, %v637
      %v640 = vshrl.u32 %v617, 16
      %v642 = vrot.slane %v640, 1
      %v643 = vshll.u32 %v617, 16
      %v645 = vrot.slane %v643, 2
      %v646 = vor.u32 %v642, %v645
      %v647 = vsel %vm621, %v637, %v646
      %v649 = vshrl.u32 %v618, 16
      %v651 = vrot.slane %v649, 1
      %v652 = vshll.u32 %v618, 16
      %v654 = vrot.slane %v652, 2
      %v655 = vor.u32 %v651, %v654
      %v656 = vsel %vm621, %v646, %v655
      %v658 = vshrl.u32 %v619, 16
      %v660 = vrot.slane %v658, 1
      %v661 = vshll.u32 %v619, 16
      %v663 = vrot.slane %v661, 2
      %v664 = vor.u32 %v660, %v663
      %v665 = vsel %vm621, %v655, %v664
      %v667 = vshrl.u32 %v620, 16
      %v669 = vrot.slane %v667, 1
      %v670 = vshll.u32 %v620, 16
      %v672 = vrot.slane %v670, 2
      %v673 = vor.u32 %v669, %v672
      %v674 = vsel %vm621, %v664, %v673
      %675 = vrot.lane.b32.xlu0 %v638, 16
      %v676 = vpop.permute.xlu0 %675
      %677 = vrot.lane.b32.xlu0 %v647, 16
      %v678 = vpop.permute.xlu0 %677
      %679 = vrot.lane.b32.xlu0 %v656, 16
      %v680 = vpop.permute.xlu0 %679
      %681 = vrot.lane.b32.xlu0 %v665, 16
      %v682 = vpop.permute.xlu0 %681
      %683 = vrot.lane.b32.xlu0 %v674, 16
      %v684 = vpop.permute.xlu0 %683
      %vm690 = vcmask 162944
      %691 = vst.msk [vmem:[#allocation3] sm:$0xff] %vm690, %v676
      %692 = vst.msk [vmem:[#allocation3 + $0x8] sm:$0xff] %vm690, %v678
      %693 = vst.msk [vmem:[#allocation3 + $0x10] sm:$0xff] %vm690, %v680
      %694 = vst.msk [vmem:[#allocation3 + $0x18] sm:$0xff] %vm690, %v682
      %695 = vst.msk [vmem:[#allocation3 + $0x20] sm:$0xff] %vm690, %v684
      %v696 = vld [vmem:[#allocation2 + $0x4] sm:$0xc]
      %v697 = vld [vmem:[#allocation2 + $0x8] sm:$0xf]
      %v698 = vld [vmem:[#allocation2 + $0xc] sm:$0xf]
      %v699 = vld [vmem:[#allocation2 + $0x10] sm:$0xf]
      %v700 = vld [vmem:[#allocation2 + $0x14] sm:$0xf]
      %v701 = vld [vmem:[#allocation2 + $0x18] sm:$0xf]
      %v702 = vld [vmem:[#allocation2 + $0x1c] sm:$0xf]
      %v703 = vld [vmem:[#allocation2 + $0x20] sm:$0xf]
      %v704 = vld [vmem:[#allocation2 + $0x24] sm:$0xf]
      %v705 = vld [vmem:[#allocation2 + $0x28] sm:$0xf]
      %v706 = vld [vmem:[#allocation2 + $0x2c] sm:$0x3]
      %v718 = vunpack.c.l.b16 %v696
      %v719 = vunpack.c.l.b16 %v697
      %v720 = vunpack.c.l.b16 %v698
      %v721 = vunpack.c.l.b16 %v699
      %v722 = vunpack.c.l.b16 %v700
      %v723 = vunpack.c.l.b16 %v701
      %v724 = vunpack.c.l.b16 %v702
      %v725 = vunpack.c.l.b16 %v703
      %v726 = vunpack.c.l.b16 %v704
      %v727 = vunpack.c.l.b16 %v705
      %v728 = vunpack.c.l.b16 %v706
      %v729 = vpack.c.b16 %v719, %v718
      %v730 = vpack.c.b16 %v721, %v720
      %v731 = vpack.c.b16 %v723, %v722
      %v732 = vpack.c.b16 %v725, %v724
      %v733 = vpack.c.b16 %v727, %v726
      %v734 = vpack.c.b16 %v728, %v728
      %vm735 = vcmask 1045504
      %v736 = vrot.slane %v729, 2
      %v737 = vrot.slane %v730, 2
      %v738 = vsel %vm735, %v736, %v737
      %v739 = vrot.slane %v731, 2
      %v740 = vsel %vm735, %v737, %v739
      %v741 = vrot.slane %v732, 2
      %v742 = vsel %vm735, %v739, %v741
      %v743 = vrot.slane %v733, 2
      %v744 = vsel %vm735, %v741, %v743
      %v745 = vrot.slane %v734, 2
      %v746 = vsel %vm735, %v743, %v745
      %747 = vrot.lane.b32.xlu0 %v738, 20
      %v748 = vpop.permute.xlu0 %747
      %749 = vrot.lane.b32.xlu0 %v740, 20
      %v750 = vpop.permute.xlu0 %749
      %751 = vrot.lane.b32.xlu0 %v742, 20
      %v752 = vpop.permute.xlu0 %751
      %753 = vrot.lane.b32.xlu0 %v744, 20
      %v754 = vpop.permute.xlu0 %753
      %755 = vrot.lane.b32.xlu0 %v746, 20
      %v756 = vpop.permute.xlu0 %755
      %vm762 = vcmask 195744
      %763 = vst.msk [vmem:[#allocation3] sm:$0xff] %vm762, %v748
      %764 = vst.msk [vmem:[#allocation3 + $0x8] sm:$0xff] %vm762, %v750
      %765 = vst.msk [vmem:[#allocation3 + $0x10] sm:$0xff] %vm762, %v752
      %766 = vst.msk [vmem:[#allocation3 + $0x18] sm:$0xff] %vm762, %v754
      %767 = vst.msk [vmem:[#allocation3 + $0x20] sm:$0xff] %vm762, %v756
      %v768 = vld [vmem:[#allocation2 + $0x8] sm:$0xc]
      %v769 = vld [vmem:[#allocation2 + $0xc] sm:$0xf]
      %v770 = vld [vmem:[#allocation2 + $0x10] sm:$0xf]
      %v771 = vld [vmem:[#allocation2 + $0x14] sm:$0xf]
      %v772 = vld [vmem:[#allocation2 + $0x18] sm:$0xf]
      %v773 = vld [vmem:[#allocation2 + $0x1c] sm:$0xf]
      %v774 = vld [vmem:[#allocation2 + $0x20] sm:$0xf]
      %v775 = vld [vmem:[#allocation2 + $0x24] sm:$0xf]
      %v776 = vld [vmem:[#allocation2 + $0x28] sm:$0xf]
      %v777 = vld [vmem:[#allocation2 + $0x2c] sm:$0xf]
      %v778 = vld [vmem:[#allocation2 + $0x30] sm:$0x3]
      %v790 = vunpack.c.l.b16 %v768
      %v791 = vunpack.c.l.b16 %v769
      %v792 = vunpack.c.l.b16 %v770
      %v793 = vunpack.c.l.b16 %v771
      %v794 = vunpack.c.l.b16 %v772
      %v795 = vunpack.c.l.b16 %v773
      %v796 = vunpack.c.l.b16 %v774
      %v797 = vunpack.c.l.b16 %v775
      %v798 = vunpack.c.l.b16 %v776
      %v799 = vunpack.c.l.b16 %v777
      %v800 = vunpack.c.l.b16 %v778
      %v801 = vpack.c.b16 %v791, %v790
      %v802 = vpack.c.b16 %v793, %v792
      %v803 = vpack.c.b16 %v795, %v794
      %v804 = vpack.c.b16 %v797, %v796
      %v805 = vpack.c.b16 %v799, %v798
      %v806 = vpack.c.b16 %v800, %v800
      %v807 = vrot.slane %v801, 2
      %v808 = vrot.slane %v802, 2
      %v809 = vsel %vm735, %v807, %v808
      %v810 = vrot.slane %v803, 2
      %v811 = vsel %vm735, %v808, %v810
      %v812 = vrot.slane %v804, 2
      %v813 = vsel %vm735, %v810, %v812
      %v814 = vrot.slane %v805, 2
      %v815 = vsel %vm735, %v812, %v814
      %v816 = vrot.slane %v806, 2
      %v817 = vsel %vm735, %v814, %v816
      %818 = vrot.lane.b32.xlu0 %v809, 24
      %v819 = vpop.permute.xlu0 %818
      %820 = vrot.lane.b32.xlu0 %v811, 24
      %v821 = vpop.permute.xlu0 %820
      %822 = vrot.lane.b32.xlu0 %v813, 24
      %v823 = vpop.permute.xlu0 %822
      %824 = vrot.lane.b32.xlu0 %v815, 24
      %v825 = vpop.permute.xlu0 %824
      %826 = vrot.lane.b32.xlu0 %v817, 24
      %v827 = vpop.permute.xlu0 %826
      %vm833 = vcmask 228544
      %834 = vst.msk [vmem:[#allocation3] sm:$0xff] %vm833, %v819
      %835 = vst.msk [vmem:[#allocation3 + $0x8] sm:$0xff] %vm833, %v821
      %836 = vst.msk [vmem:[#allocation3 + $0x10] sm:$0xff] %vm833, %v823
      %837 = vst.msk [vmem:[#allocation3 + $0x18] sm:$0xff] %vm833, %v825
      %838 = vst.msk [vmem:[#allocation3 + $0x20] sm:$0xff] %vm833, %v827
      %v839 = vld [vmem:[#allocation2 + $0x8] sm:$0xc]
      %v840 = vld [vmem:[#allocation2 + $0xc] sm:$0xf]
      %v841 = vld [vmem:[#allocation2 + $0x10] sm:$0xf]
      %v842 = vld [vmem:[#allocation2 + $0x14] sm:$0xf]
      %v843 = vld [vmem:[#allocation2 + $0x18] sm:$0xf]
      %v844 = vld [vmem:[#allocation2 + $0x1c] sm:$0xf]
      %v845 = vld [vmem:[#allocation2 + $0x20] sm:$0xf]
      %v846 = vld [vmem:[#allocation2 + $0x24] sm:$0xf]
      %v847 = vld [vmem:[#allocation2 + $0x28] sm:$0xf]
      %v848 = vld [vmem:[#allocation2 + $0x2c] sm:$0xf]
      %v849 = vld [vmem:[#allocation2 + $0x30] sm:$0x7]
      %v861 = vunpack.c.l.b16 %v839
      %v862 = vunpack.c.l.b16 %v840
      %v863 = vunpack.c.l.b16 %v841
      %v864 = vunpack.c.l.b16 %v842
      %v865 = vunpack.c.l.b16 %v843
      %v866 = vunpack.c.l.b16 %v844
      %v867 = vunpack.c.l.b16 %v845
      %v868 = vunpack.c.l.b16 %v846
      %v869 = vunpack.c.l.b16 %v847
      %v870 = vunpack.c.l.b16 %v848
      %v871 = vunpack.c.l.b16 %v849
      %v872 = vpack.c.b16 %v862, %v861
      %v873 = vpack.c.b16 %v864, %v863
      %v874 = vpack.c.b16 %v866, %v865
      %v875 = vpack.c.b16 %v868, %v867
      %v876 = vpack.c.b16 %v870, %v869
      %v877 = vpack.c.b16 %v871, %v871
      %vm878 = vsmask.f32 5376
      %v880 = vshrl.u32 %v872, 16
      %v882 = vrot.slane %v880, 2
      %v883 = vshll.u32 %v872, 16
      %v885 = vrot.slane %v883, 3
      %v886 = vor.u32 %v882, %v885
      %v888 = vshrl.u32 %v873, 16
      %v890 = vrot.slane %v888, 2
      %v891 = vshll.u32 %v873, 16
      %v893 = vrot.slane %v891, 3
      %v894 = vor.u32 %v890, %v893
      %v895 = vsel %vm878, %v886, %v894
      %v897 = vshrl.u32 %v874, 16
      %v899 = vrot.slane %v897, 2
      %v900 = vshll.u32 %v874, 16
      %v902 = vrot.slane %v900, 3
      %v903 = vor.u32 %v899, %v902
      %v904 = vsel %vm878, %v894, %v903
      %v906 = vshrl.u32 %v875, 16
      %v908 = vrot.slane %v906, 2
      %v909 = vshll.u32 %v875, 16
      %v911 = vrot.slane %v909, 3
      %v912 = vor.u32 %v908, %v911
      %v913 = vsel %vm878, %v903, %v912
      %v915 = vshrl.u32 %v876, 16
      %v917 = vrot.slane %v915, 2
      %v918 = vshll.u32 %v876, 16
      %v920 = vrot.slane %v918, 3
      %v921 = vor.u32 %v917, %v920
      %v922 = vsel %vm878, %v912, %v921
      %v924 = vshrl.u32 %v877, 16
      %v926 = vrot.slane %v924, 2
      %v927 = vshll.u32 %v877, 16
      %v929 = vrot.slane %v927, 3
      %v930 = vor.u32 %v926, %v929
      %v931 = vsel %vm878, %v921, %v930
      %932 = vrot.lane.b32.xlu0 %v895, 28
      %v933 = vpop.permute.xlu0 %932
      %934 = vrot.lane.b32.xlu0 %v904, 28
      %v935 = vpop.permute.xlu0 %934
      %936 = vrot.lane.b32.xlu0 %v913, 28
      %v937 = vpop.permute.xlu0 %936
      %938 = vrot.lane.b32.xlu0 %v922, 28
      %v939 = vpop.permute.xlu0 %938
      %940 = vrot.lane.b32.xlu0 %v931, 28
      %v941 = vpop.permute.xlu0 %940
      %vm947 = vcmask 261344
      %948 = vst.msk [vmem:[#allocation3] sm:$0xff] %vm947, %v933
      %949 = vst.msk [vmem:[#allocation3 + $0x8] sm:$0xff] %vm947, %v935
      %950 = vst.msk [vmem:[#allocation3 + $0x10] sm:$0xff] %vm947, %v937
      %951 = vst.msk [vmem:[#allocation3 + $0x18] sm:$0xff] %vm947, %v939
      %952 = vst.msk [vmem:[#allocation3 + $0x20] sm:$0xff] %vm947, %v941
      %v953 = vld [vmem:[#allocation2 + $0x8] sm:$0x8]
      %v954 = vld [vmem:[#allocation2 + $0xc] sm:$0xf]
      %v955 = vld [vmem:[#allocation2 + $0x10] sm:$0xf]
      %v956 = vld [vmem:[#allocation2 + $0x14] sm:$0xf]
      %v957 = vld [vmem:[#allocation2 + $0x18] sm:$0xf]
      %v958 = vld [vmem:[#allocation2 + $0x1c] sm:$0xf]
      %v959 = vld [vmem:[#allocation2 + $0x20] sm:$0xf]
      %v960 = vld [vmem:[#allocation2 + $0x24] sm:$0xf]
      %v961 = vld [vmem:[#allocation2 + $0x28] sm:$0xf]
      %v962 = vld [vmem:[#allocation2 + $0x2c] sm:$0xf]
      %v963 = vld [vmem:[#allocation2 + $0x30] sm:$0x7]
      %v975 = vunpack.c.l.b16 %v953
      %v976 = vunpack.c.l.b16 %v954
      %v977 = vunpack.c.l.b16 %v955
      %v978 = vunpack.c.l.b16 %v956
      %v979 = vunpack.c.l.b16 %v957
      %v980 = vunpack.c.l.b16 %v958
      %v981 = vunpack.c.l.b16 %v959
      %v982 = vunpack.c.l.b16 %v960
      %v983 = vunpack.c.l.b16 %v961
      %v984 = vunpack.c.l.b16 %v962
      %v985 = vunpack.c.l.b16 %v963
      %v986 = vpack.c.b16 %v976, %v975
      %v987 = vpack.c.b16 %v978, %v977
      %v988 = vpack.c.b16 %v980, %v979
      %v989 = vpack.c.b16 %v982, %v981
      %v990 = vpack.c.b16 %v984, %v983
      %v991 = vpack.c.b16 %v985, %v985
      %vm992 = vcmask 1044480
      %v993 = vrot.slane %v986, 3
      %v994 = vrot.slane %v987, 3
      %v995 = vsel %vm992, %v993, %v994
      %v996 = vrot.slane %v988, 3
      %v997 = vsel %vm992, %v994, %v996
      %v998 = vrot.slane %v989, 3
      %v999 = vsel %vm992, %v996, %v998
      %v1000 = vrot.slane %v990, 3
      %v1001 = vsel %vm992, %v998, %v1000
      %v1002 = vrot.slane %v991, 3
      %v1003 = vsel %vm992, %v1000, %v1002
      %1004 = vrot.lane.b32.xlu0 %v995, 32
      %v1005 = vpop.permute.xlu0 %1004
      %1006 = vrot.lane.b32.xlu0 %v997, 32
      %v1007 = vpop.permute.xlu0 %1006
      %1008 = vrot.lane.b32.xlu0 %v999, 32
      %v1009 = vpop.permute.xlu0 %1008
      %1010 = vrot.lane.b32.xlu0 %v1001, 32
      %v1011 = vpop.permute.xlu0 %1010
      %1012 = vrot.lane.b32.xlu0 %v1003, 32
      %v1013 = vpop.permute.xlu0 %1012
      %vm1019 = vcmask 294144
      %1020 = vst.msk [vmem:[#allocation3] sm:$0xff] %vm1019, %v1005
      %1021 = vst.msk [vmem:[#allocation3 + $0x8] sm:$0xff] %vm1019, %v1007
      %1022 = vst.msk [vmem:[#allocation3 + $0x10] sm:$0xff] %vm1019, %v1009
      %1023 = vst.msk [vmem:[#allocation3 + $0x18] sm:$0xff] %vm1019, %v1011
      %1024 = vst.msk [vmem:[#allocation3 + $0x20] sm:$0xff] %vm1019, %v1013
      %v1025 = vld [vmem:[#allocation3] sm:$0xff]
      %v1026 = vld [vmem:[#allocation3 + $0x8] sm:$0xff]
      %v1027 = vld [vmem:[#allocation3 + $0x10] sm:$0xff]
      %v1028 = vld [vmem:[#allocation3 + $0x18] sm:$0xff]
      %v1029 = vld [vmem:[#allocation3 + $0x20] sm:$0xff]
      %v1030 = vld [vmem:[%s1] sm:$0xf]
      %v1031 = vld [vmem:[%s1 + $0x4] sm:$0xf]
      %v1032 = vld [vmem:[%s1 + $0x8] sm:$0xf]
      %v1033 = vld [vmem:[%s1 + $0xc] sm:$0xf]
      %v1034 = vld [vmem:[%s1 + $0x10] sm:$0x3]
      %v1040 = vunpack.c.l.b16 %v1030
      %v1041 = vunpack.c.l.b16 %v1031
      %v1042 = vunpack.c.l.b16 %v1032
      %v1043 = vunpack.c.l.b16 %v1033
      %v1044 = vunpack.c.l.b16 %v1034
      %v1045 = vpack.c.b16 %v1041, %v1040
      %v1046 = vpack.c.b16 %v1043, %v1042
      %v1047 = vpack.c.b16 %v1044, %v1044
      %vm1050 = vcmask 293888
      %v1052 = vsel %vm1050, %v1025, 0
      %v1055 = vsel %vm1050, %v1026, 0
      %v1058 = vsel %vm1050, %v1027, 0
      %v1061 = vsel %vm1050, %v1028, 0
      %v1064 = vsel %vm1050, %v1029, 0
      %vm1066 = vcmask 1041408
      %v1068 = vsel %vm1066, %v1047, 0
      %1070 = vmatprep.subr.bf16.mxu0 0
      %1071 = vmatpush1.bf16.msra.mxu0 %v1045
      %1072 = vmatprep.subr.bf16.mxu0 0
      %1073 = vmatpush1.bf16.msra.mxu0 %v1046
      %1074 = vmatprep.subr.bf16.mxu0 0
      %1075 = vmatpush1.bf16.msra.mxu0 %v1068
      %1076 = vmatprep.subr.bf16.mxu0 0
      %1077 = vmatpush1.bf16.msra.mxu0 0
      %1078 = vmatprep.subr.bf16.mxu0 0
      %1079 = vmatpush1.bf16.msra.mxu0 0
      %1080 = vmatprep.subr.bf16.mxu0 0
      %1081 = vmatpush1.bf16.msra.mxu0 0
      %1082 = vmatprep.subr.bf16.mxu0 0
      %1083 = vmatpush1.bf16.msra.mxu0 0
      %1084 = vmatprep.subr.bf16.mxu0 0
      %1085 = vmatpush1.bf16.msra.mxu0 0
      %1086 = vmatprep.subr.bf16.mxu0 0
      %1087 = vmatpush1.bf16.msra.mxu0 0
      %1088 = vmatprep.subr.bf16.mxu0 0
      %1089 = vmatpush1.bf16.msra.mxu0 0
      %1090 = vmatprep.subr.bf16.mxu0 0
      %1091 = vmatpush1.bf16.msra.mxu0 0
      %1092 = vmatprep.subr.bf16.mxu0 0
      %1093 = vmatpush1.bf16.msra.mxu0 0
      %1094 = vmatprep.subr.bf16.mxu0 0
      %1095 = vmatpush1.bf16.msra.mxu0 0
      %1096 = vmatprep.subr.bf16.mxu0 0
      %1097 = vmatpush1.bf16.msra.mxu0 0
      %1098 = vmatprep.subr.bf16.mxu0 0
      %1099 = vmatpush1.bf16.msra.mxu0 0
      %1100 = vmatprep.subr.bf16.mxu0 0
      %1101 = vmatpush1.bf16.msra.mxu0 0
      %1102 = vmatprep.mubr.bf16.mxu0 0
      %1103 = vmatmul.mubr.bf16.gmra.mrb[0].mxu0 %v1052
      %v1104 = vpop.f32.mrb[0].mxu0
      %v1105 = vadd.f32 0.0, %v1104
      %v1106 = vpop.f32.mrb[0].mxu0
      %v1107 = vpop.f32.mrb[0].mxu0
      %v1108 = vadd.f32 0.0, %v1107
      %v1109 = vpop.f32.mrb[0].mxu0
      %1110 = vmatprep.mubr.bf16.mxu0 0
      %1111 = vmatmul.mubr.bf16.gmra.mrb[0].mxu0 %v1055
      %v1112 = vpop.f32.mrb[0].mxu0
      %v1113 = vadd.f32 0.0, %v1112
      %v1114 = vpop.f32.mrb[0].mxu0
      %v1115 = vpop.f32.mrb[0].mxu0
      %v1116 = vadd.f32 0.0, %v1115
      %v1117 = vpop.f32.mrb[0].mxu0
      %1118 = vmatprep.mubr.bf16.mxu0 0
      %1119 = vmatmul.mubr.bf16.gmra.mrb[0].mxu0 %v1058
      %v1120 = vpop.f32.mrb[0].mxu0
      %v1121 = vadd.f32 0.0, %v1120
      %v1122 = vpop.f32.mrb[0].mxu0
      %v1123 = vpop.f32.mrb[0].mxu0
      %v1124 = vadd.f32 0.0, %v1123
      %v1125 = vpop.f32.mrb[0].mxu0
      %1126 = vmatprep.mubr.bf16.mxu0 0
      %1127 = vmatmul.mubr.bf16.gmra.mrb[0].mxu0 %v1061
      %v1128 = vpop.f32.mrb[0].mxu0
      %v1129 = vadd.f32 0.0, %v1128
      %v1130 = vpop.f32.mrb[0].mxu0
      %v1131 = vpop.f32.mrb[0].mxu0
      %v1132 = vadd.f32 0.0, %v1131
      %v1133 = vpop.f32.mrb[0].mxu0
      %1134 = vmatprep.mubr.bf16.mxu0 0
      %1135 = vmatmul.mubr.bf16.gmra.mrb[0].mxu0 %v1064
      %v1136 = vpop.f32.mrb[0].mxu0
      %v1137 = vadd.f32 0.0, %v1136
      %v1138 = vpop.f32.mrb[0].mxu0
      %v1139 = vpop.f32.mrb[0].mxu0
      %v1140 = vadd.f32 0.0, %v1139
      %v1141 = vpop.f32.mrb[0].mxu0
      %1142 = vdwg.mxu0
      %vm1143 = vcmp.ge.f32.partialorder %v1105, 0.0
      %vm1144 = vcmp.ge.f32.partialorder %v1108, 0.0
      %vm1145 = vcmp.ge.f32.partialorder %v1113, 0.0
      %vm1146 = vcmp.ge.f32.partialorder %v1116, 0.0
      %vm1147 = vcmp.ge.f32.partialorder %v1121, 0.0
      %vm1148 = vcmp.ge.f32.partialorder %v1124, 0.0
      %vm1149 = vcmp.ge.f32.partialorder %v1129, 0.0
      %vm1150 = vcmp.ge.f32.partialorder %v1132, 0.0
      %vm1151 = vcmp.ge.f32.partialorder %v1137, 0.0
      %vm1152 = vcmp.ge.f32.partialorder %v1140, 0.0
      %v1153 = vmul.f32 %v1105, 0.2
      %v1154 = vmul.f32 %v1108, 0.2
      %v1155 = vmul.f32 %v1113, 0.2
      %v1156 = vmul.f32 %v1116, 0.2
      %v1157 = vmul.f32 %v1121, 0.2
      %v1158 = vmul.f32 %v1124, 0.2
      %v1159 = vmul.f32 %v1129, 0.2
      %v1160 = vmul.f32 %v1132, 0.2
      %v1161 = vmul.f32 %v1137, 0.2
      %v1162 = vmul.f32 %v1140, 0.2
      %v1163 = vsel %vm1143, %v1105, %v1153
      %v1164 = vsel %vm1144, %v1108, %v1154
      %v1165 = vsel %vm1145, %v1113, %v1155
      %v1166 = vsel %vm1146, %v1116, %v1156
      %v1167 = vsel %vm1147, %v1121, %v1157
      %v1168 = vsel %vm1148, %v1124, %v1158
      %v1169 = vsel %vm1149, %v1129, %v1159
      %v1170 = vsel %vm1150, %v1132, %v1160
      %v1171 = vsel %vm1151, %v1137, %v1161
      %v1172 = vsel %vm1152, %v1140, %v1162
      %vm1173 = vcmask 64512
      %1174 = vst.msk [vmem:[%s143] sm:$0xff] %vm1173, %v1163
      %1175 = vst.msk [vmem:[%s143 + $0x8] sm:$0xff] %vm1173, %v1164
      %1176 = vst.msk [vmem:[%s143 + $0x10] sm:$0xff] %vm1173, %v1165
      %1177 = vst.msk [vmem:[%s143 + $0x18] sm:$0xff] %vm1173, %v1166
      %1178 = vst.msk [vmem:[%s143 + $0x20] sm:$0xff] %vm1173, %v1167
      %1179 = vst.msk [vmem:[%s143 + $0x28] sm:$0xff] %vm1173, %v1168
      %1180 = vst.msk [vmem:[%s143 + $0x30] sm:$0xff] %vm1173, %v1169
      %1181 = vst.msk [vmem:[%s143 + $0x38] sm:$0xff] %vm1173, %v1170
      %1182 = vst.msk [vmem:[%s143 + $0x40] sm:$0xff] %vm1173, %v1171
      %1183 = vst.msk [vmem:[%s143 + $0x48] sm:$0xff] %vm1173, %v1172
      %p1184 = scmp.lt.s32.totalorder %s13, 1
      %s1185 = scalar_select %p1184, %s13, 1
      %s1186 = smul.addr %s1185, 10
      %s1187 = smul.addr %s1186, 8
      %s1188 = scalar_lea.vmem %s2, %s1187
      // Predicated region
      $region29: #{tpu_custom_call.1} parent=27 // pred_check
        %p1189 = pneg %p78
      $region30: #{tpu_custom_call.1} parent=27 // pred_check_branch
        %1191 = sbr.rel (%p1189) target = $region32
      $region31: #{tpu_custom_call.1} parent=27 // pred_region
        _
      $region32: #{tpu_custom_call.1} parent=27 // pred_fallthru
        _
    $region28: #{tpu_custom_call.1} parent=5 // pred_fallthru
      _
    %p1192 = scmp.le.s32.totalorder 2, %s8
    // Predicated region
    $region33: #{tpu_custom_call.1} parent=5 // pred_check
      %p1193 = pneg %p1192
    $region34: #{tpu_custom_call.1} parent=5 // pred_check_branch
      %1195 = sbr.rel (%p1193) target = $region36
    $region35: #{tpu_custom_call.1} parent=5 // pred_region
      %s1196 = ssub.s32 %s8, 2
      // Predicated region
      $region37: #{tpu_custom_call.1} parent=35 // pred_check
        %p1197 = pneg %p84
      $region38: #{tpu_custom_call.1} parent=35 // pred_check_branch
        %1199 = sbr.rel (%p1197) target = $region40
      $region39: #{tpu_custom_call.1} parent=35 // pred_region
        %p1200 = scmp.lt.s32.totalorder %s14, 1
        %s1201 = scalar_select %p1200, %s14, 1
        %s1202 = smul.addr %s1201, 10
        %s1203 = smul.addr %s1202, 8
        %s1204 = scalar_lea.vmem %s2, %s1203
      $region40: #{tpu_custom_call.1} parent=35 // pred_fallthru
        _
    $region36: #{tpu_custom_call.1} parent=5 // pred_fallthru
      _
  $region6: #{tpu_custom_call.1} parent=0 // loop_footer
    %s12 = sadd.s32 1, %s8
  $region7: #{tpu_custom_call.1} parent=0 // loop_footer_branch
    %7 = sbr.rel target = $region3
  $region8: #{tpu_custom_call.1} parent=0 // loop_exit
    _

</llo_original>
